<compile_context>
chip_gen: v7x
topology: tpu7x:2x2x1
jax: 0.10.0
libtpu: 0.0.40
codegen_flags: <defaults>
</compile_context>

<pallas_src>
import functools

import jax
import jax.numpy as jnp
from jax.experimental import pallas as pl
from jax.experimental.pallas import tpu as pltpu


def _attention_kernel(q_ref, v_ref, w0q_ref, w0v_ref, b0_ref, w1t_ref, out_ref,
                      *, mxu_dtype):
    f32 = jnp.float32
    q = q_ref[...].astype(mxu_dtype)                      # (BT, D)
    v = v_ref[...].astype(mxu_dtype)                      # (R, D)

    # linear0, split across the concat; b0 folded into hq once (hoisted broadcast).
    hq = jnp.dot(q, w0q_ref[...].astype(mxu_dtype),
                 preferred_element_type=f32) + b0_ref[...].astype(f32)     # (BT, H)
    hv = jnp.dot(v, w0v_ref[...].astype(mxu_dtype),
                 preferred_element_type=f32)                               # (R, H)
    h = jnp.maximum(hq[:, None, :] + hv[None, :, :], 0.0)                  # (BT, R, H) f32

    w1t = w1t_ref[...].astype(f32)                        # (G, H): glimpse rows, H on lanes
    num_glimpses = w1t.shape[0]

    for g in range(num_glimpses):                         # G is tiny; unrolled at trace time
        # linear1 for glimpse g as a VPU lane-reduction over H -> (BT, R), R on lanes.
        # (b1[g] is omitted: it is constant along R and cancels in the softmax below.)
        logits = jnp.sum(h * w1t[None, g:g + 1, :], axis=-1)               # (BT, R)
        # softmax over regions (torch dim=1) == last-axis (lane) reduction here.
        m = jnp.max(logits, axis=-1, keepdims=True)
        e = jnp.exp(logits - m)
        s = jnp.sum(e, axis=-1, keepdims=True)
        attn = e * pl.reciprocal(s, approx=True)                           # (BT, R) f32
        # glimpse-g weighted sum over regions: one MXU dot, one dense (BT, D) store.
        out_ref[g] = jnp.dot(attn.astype(mxu_dtype), v,
                             preferred_element_type=f32).astype(out_ref.dtype)


def _pick_batch_tile(batch, max_bt=128):
    """Largest multiple-of-8 tile <= max_bt that divides `batch`, else the full batch.

    max_bt=128 keeps the dominant VMEM temporary h = (bt, R, H) f32 comfortably under
    v7x's 32 MiB scoped-VMEM default at typical R/H; raise max_bt (and set
    pltpu.CompilerParams(vmem_limit_bytes=...)) for bigger blocks on v5e/v6e.
    """
    if batch <= max_bt:
        return batch
    for bt in range(max_bt, 7, -8):
        if batch % bt == 0:
            return bt
    return batch


def attention_forward(q, v, w0, b0, w1, b1, *, mxu_dtype=None, batch_block=None):
    """q: (B, D), v: (1, R, D) -> (B, G*D).

    mxu_dtype: dtype fed to the MXU dots (use jnp.bfloat16 on v6e/v7x for peak MXU
               throughput); softmax / accumulation always stay in float32.
    """
    B, D = q.shape
    R = v.shape[1]
    H = w0.shape[1]
    G = w1.shape[1]
    assert w0.shape[0] == 2 * D, "linear0 expects the concat [q, v] on its input"

    if mxu_dtype is None:
        mxu_dtype = q.dtype
    bt = batch_block if batch_block is not None else _pick_batch_tile(B)
    assert B % bt == 0, "batch tile must divide the batch"

    v2 = v[0]                  # (R, D)
    w0q = w0[:D]               # (D, H): acts on the q half of the concat
    w0v = w0[D:]               # (D, H): acts on the v half
    b0_2 = b0.reshape(1, H)
    w1t = jnp.transpose(w1)    # (G, H): glimpse rows -> H lane-major inside the kernel
    del b1                     # cancels exactly in the softmax over regions (see kernel)

    bcast = lambda i: (0, 0)   # v / weights are shared across all batch blocks
    out_gbd = pl.pallas_call(
        functools.partial(_attention_kernel, mxu_dtype=mxu_dtype),
        grid=(B // bt,),
        in_specs=[
            pl.BlockSpec((bt, D), lambda i: (i, 0)),   # q   (batch-tiled)
            pl.BlockSpec((R, D), bcast),               # v
            pl.BlockSpec((D, H), bcast),               # w0_q
            pl.BlockSpec((D, H), bcast),               # w0_v
            pl.BlockSpec((1, H), bcast),               # b0
            pl.BlockSpec((G, H), bcast),               # w1^T
        ],
        out_specs=pl.BlockSpec((G, bt, D), lambda i: (0, i, 0)),
        out_shape=jax.ShapeDtypeStruct((G, B, D), q.dtype),
        compiler_params=pltpu.CompilerParams(
            dimension_semantics=("parallel",),         # megacore / v7x 2-TC split
        ),
    )(q, v2, w0q, w0v, b0_2, w1t)

    # (G, B, D) -> (B, G*D): pure layout plumbing, handled by XLA outside the kernel.
    return jnp.transpose(out_gbd, (1, 0, 2)).reshape(B, G * D)


def attention_reference(q, v, w0, b0, w1, b1):
    """Pure-JAX reference mirroring the PyTorch forward (mlp_glimpses > 0 path)."""
    B, D = q.shape
    R = v.shape[1]
    qb = jnp.broadcast_to(q[:, None, :], (B, R, D))
    vb = jnp.broadcast_to(v, (B, R, D))
    alpha = jnp.concatenate([qb, vb], axis=-1)                     # (B, R, 2D)
    h = jax.nn.relu(alpha @ w0 + b0)
    logits = h @ w1 + b1                                           # (B, R, G)
    attn = jax.nn.softmax(logits, axis=1)
    # NOTE: torch's alpha.unsqueeze(2).expand_as(v) only type-checks when B == 1;
    # we implement the intended broadcast of v's batch dim over the query batch.
    outs = [jnp.sum(attn[:, :, g:g + 1] * v, axis=1) for g in range(logits.shape[2])]
    return jnp.concatenate(outs, axis=1)


if __name__ == "__main__":
    # Small shapes consistent with the module:
    #   q: (batch, dim), v: (1, regions, dim), input_dim = 2*dim (concat fusion)
    B, R, D = 2, 8, 16
    input_dim = 2 * D           # 32
    hidden_units = 32
    mlp_glimpses = 2
    # smooth = 10.0             # stored by the module but unused in forward

    key = jax.random.PRNGKey(0)
    kq, kv, kw0, kb0, kw1, kb1 = jax.random.split(key, 6)

    q = jax.random.normal(kq, (B, D), dtype=jnp.float32)
    v = jax.random.normal(kv, (1, R, D), dtype=jnp.float32)
    w0 = 0.1 * jax.random.normal(kw0, (input_dim, hidden_units), dtype=jnp.float32)
    b0 = 0.1 * jax.random.normal(kb0, (hidden_units,), dtype=jnp.float32)
    w1 = 0.1 * jax.random.normal(kw1, (hidden_units, mlp_glimpses), dtype=jnp.float32)
    b1 = 0.1 * jax.random.normal(kb1, (mlp_glimpses,), dtype=jnp.float32)

    ref = attention_reference(q, v, w0, b0, w1, b1)

    # f32 MXU operands (tolerance covers the EUP approximate-reciprocal softmax).
    out = jax.block_until_ready(attention_forward(q, v, w0, b0, w1, b1))
    assert out.shape == (B, mlp_glimpses * D), out.shape
    assert jnp.allclose(out, ref, atol=1e-2, rtol=1e-2), float(jnp.max(jnp.abs(out - ref)))

    # bf16 MXU operands (recommended on v6e/v7x); softmax math stays f32.
    out_bf16 = jax.block_until_ready(
        attention_forward(q, v, w0, b0, w1, b1, mxu_dtype=jnp.bfloat16))
    assert out_bf16.shape == (B, mlp_glimpses * D), out_bf16.shape
    assert jnp.allclose(out_bf16, ref, atol=5e-2, rtol=5e-2), float(
        jnp.max(jnp.abs(out_bf16 - ref)))

    print("KERNEL_OK")
</pallas_src>

<mosaic_0001>
module attributes {stable_mosaic.version = 11 : i64} {
  func.func @_attention_kernel(%arg0: i32, %arg1: memref<2x16xf32, #tpu.memory_space<vmem>>, %arg2: memref<8x16xf32, #tpu.memory_space<vmem>>, %arg3: memref<16x32xf32, #tpu.memory_space<vmem>>, %arg4: memref<16x32xf32, #tpu.memory_space<vmem>>, %arg5: memref<1x32xf32, #tpu.memory_space<vmem>>, %arg6: memref<2x32xf32, #tpu.memory_space<vmem>>, %arg7: memref<2x2x16xf32, #tpu.memory_space<vmem>>) attributes {dimension_semantics = [#tpu.dimension_semantics<parallel>], iteration_bounds = array<i64: 1>, scalar_prefetch = 0 : i64, scratch_operands = 0 : i64, tpu.core_type = #tpu.core_type<tc>, window_params = [{transform_indices = @transform_0, window_bounds = array<i64: 2, 16>}, {pipeline_mode = #tpu.pipeline_mode<synchronous>, transform_indices = @transform_1, window_bounds = array<i64: 8, 16>}, {pipeline_mode = #tpu.pipeline_mode<synchronous>, transform_indices = @transform_2, window_bounds = array<i64: 16, 32>}, {pipeline_mode = #tpu.pipeline_mode<synchronous>, transform_indices = @transform_3, window_bounds = array<i64: 16, 32>}, {pipeline_mode = #tpu.pipeline_mode<synchronous>, transform_indices = @transform_4, window_bounds = array<i64: 1, 32>}, {pipeline_mode = #tpu.pipeline_mode<synchronous>, transform_indices = @transform_5, window_bounds = array<i64: 2, 32>}, {transform_indices = @transform_6, window_bounds = array<i64: 2, 2, 16>}]} {
    %c0 = arith.constant 0 : index
    %c0_0 = arith.constant 0 : index
    %0 = vector.load %arg1[%c0, %c0_0] : memref<2x16xf32, #tpu.memory_space<vmem>>, vector<2x16xf32>
    %c0_1 = arith.constant 0 : index
    %c0_2 = arith.constant 0 : index
    %1 = vector.load %arg2[%c0_1, %c0_2] : memref<8x16xf32, #tpu.memory_space<vmem>>, vector<8x16xf32>
    %c0_3 = arith.constant 0 : index
    %c0_4 = arith.constant 0 : index
    %2 = vector.load %arg3[%c0_3, %c0_4] : memref<16x32xf32, #tpu.memory_space<vmem>>, vector<16x32xf32>
    %cst = arith.constant dense<0.000000e+00> : vector<2x32xf32>
    %3 = tpu.matmul %0, %2, %cst {dimension_numbers = #tpu.dot_dimension_numbers<[1], [0], [0], [1], [0, 0, 1, 1], [], []>} : vector<2x16xf32>, vector<16x32xf32>, vector<2x32xf32> -> vector<2x32xf32>
    %c0_5 = arith.constant 0 : index
    %c0_6 = arith.constant 0 : index
    %4 = vector.load %arg5[%c0_5, %c0_6] : memref<1x32xf32, #tpu.memory_space<vmem>>, vector<1x32xf32>
    %5 = vector.broadcast %4 : vector<1x32xf32> to vector<2x32xf32>
    %6 = arith.addf %3, %5 : vector<2x32xf32>
    %c0_7 = arith.constant 0 : index
    %c0_8 = arith.constant 0 : index
    %7 = vector.load %arg4[%c0_7, %c0_8] : memref<16x32xf32, #tpu.memory_space<vmem>>, vector<16x32xf32>
    %cst_9 = arith.constant dense<0.000000e+00> : vector<8x32xf32>
    %8 = tpu.matmul %1, %7, %cst_9 {dimension_numbers = #tpu.dot_dimension_numbers<[1], [0], [0], [1], [0, 0, 1, 1], [], []>} : vector<8x16xf32>, vector<16x32xf32>, vector<8x32xf32> -> vector<8x32xf32>
    %9 = vector.shape_cast %6 : vector<2x32xf32> to vector<2x1x32xf32>
    %10 = vector.shape_cast %8 : vector<8x32xf32> to vector<1x8x32xf32>
    %11 = vector.broadcast %9 : vector<2x1x32xf32> to vector<2x8x32xf32>
    %12 = vector.broadcast %10 : vector<1x8x32xf32> to vector<2x8x32xf32>
    %13 = arith.addf %11, %12 : vector<2x8x32xf32>
    %cst_10 = arith.constant 0.000000e+00 : f32
    %14 = vector.broadcast %cst_10 : f32 to vector<2x8x32xf32>
    %15 = arith.maximumf %13, %14 : vector<2x8x32xf32>
    %c0_11 = arith.constant 0 : index
    %c0_12 = arith.constant 0 : index
    %16 = vector.load %arg6[%c0_11, %c0_12] : memref<2x32xf32, #tpu.memory_space<vmem>>, vector<2x32xf32>
    %17 = vector.extract_strided_slice %16 {offsets = [0, 0], sizes = [1, 32], strides = [1, 1]} : vector<2x32xf32> to vector<1x32xf32>
    %18 = vector.shape_cast %17 : vector<1x32xf32> to vector<1x1x32xf32>
    %19 = vector.broadcast %18 : vector<1x1x32xf32> to vector<2x8x32xf32>
    %20 = arith.mulf %15, %19 : vector<2x8x32xf32>
    %cst_13 = arith.constant dense<0.000000e+00> : vector<2x8xf32>
    %21 = vector.multi_reduction <add>, %20, %cst_13 [2] : vector<2x8x32xf32> to vector<2x8xf32>
    %cst_14 = arith.constant dense<0xFF800000> : vector<2xf32>
    %22 = vector.multi_reduction <maximumf>, %21, %cst_14 [1] : vector<2x8xf32> to vector<2xf32>
    %23 = vector.shape_cast %22 : vector<2xf32> to vector<2x1xf32>
    %24 = vector.broadcast %23 : vector<2x1xf32> to vector<2x8xf32>
    %25 = arith.subf %21, %24 : vector<2x8xf32>
    %26 = math.exp %25 : vector<2x8xf32>
    %cst_15 = arith.constant dense<0.000000e+00> : vector<2xf32>
    %27 = vector.multi_reduction <add>, %26, %cst_15 [1] : vector<2x8xf32> to vector<2xf32>
    %28 = vector.shape_cast %27 : vector<2xf32> to vector<2x1xf32>
    %29 = tpu.reciprocal %28 {approx = true} : vector<2x1xf32> -> vector<2x1xf32>
    %30 = vector.broadcast %29 : vector<2x1xf32> to vector<2x8xf32>
    %31 = arith.mulf %26, %30 : vector<2x8xf32>
    %cst_16 = arith.constant dense<0.000000e+00> : vector<2x16xf32>
    %32 = tpu.matmul %31, %1, %cst_16 {dimension_numbers = #tpu.dot_dimension_numbers<[1], [0], [0], [1], [0, 0, 1, 1], [], []>} : vector<2x8xf32>, vector<8x16xf32>, vector<2x16xf32> -> vector<2x16xf32>
    %c0_17 = arith.constant 0 : index
    %c0_18 = arith.constant 0 : index
    %c0_19 = arith.constant 0 : index
    %33 = vector.load %arg7[%c0_17, %c0_18, %c0_19] : memref<2x2x16xf32, #tpu.memory_space<vmem>>, vector<1x2x16xf32>
    %34 = vector.shape_cast %33 : vector<1x2x16xf32> to vector<2x16xf32>
    %35 = vector.shape_cast %32 : vector<2x16xf32> to vector<1x2x16xf32>
    tpu.vector_store %arg7[%c0_17, %c0_18, %c0_19], %35 {strides = array<i32>} : memref<2x2x16xf32, #tpu.memory_space<vmem>>, vector<1x2x16xf32>,
    %36 = vector.extract_strided_slice %16 {offsets = [1, 0], sizes = [1, 32], strides = [1, 1]} : vector<2x32xf32> to vector<1x32xf32>
    %37 = vector.shape_cast %36 : vector<1x32xf32> to vector<1x1x32xf32>
    %38 = vector.broadcast %37 : vector<1x1x32xf32> to vector<2x8x32xf32>
    %39 = arith.mulf %15, %38 : vector<2x8x32xf32>
    %cst_20 = arith.constant dense<0.000000e+00> : vector<2x8xf32>
    %40 = vector.multi_reduction <add>, %39, %cst_20 [2] : vector<2x8x32xf32> to vector<2x8xf32>
    %cst_21 = arith.constant dense<0xFF800000> : vector<2xf32>
    %41 = vector.multi_reduction <maximumf>, %40, %cst_21 [1] : vector<2x8xf32> to vector<2xf32>
    %42 = vector.shape_cast %41 : vector<2xf32> to vector<2x1xf32>
    %43 = vector.broadcast %42 : vector<2x1xf32> to vector<2x8xf32>
    %44 = arith.subf %40, %43 : vector<2x8xf32>
    %45 = math.exp %44 : vector<2x8xf32>
    %cst_22 = arith.constant dense<0.000000e+00> : vector<2xf32>
    %46 = vector.multi_reduction <add>, %45, %cst_22 [1] : vector<2x8xf32> to vector<2xf32>
    %47 = vector.shape_cast %46 : vector<2xf32> to vector<2x1xf32>
    %48 = tpu.reciprocal %47 {approx = true} : vector<2x1xf32> -> vector<2x1xf32>
    %49 = vector.broadcast %48 : vector<2x1xf32> to vector<2x8xf32>
    %50 = arith.mulf %45, %49 : vector<2x8xf32>
    %cst_23 = arith.constant dense<0.000000e+00> : vector<2x16xf32>
    %51 = tpu.matmul %50, %1, %cst_23 {dimension_numbers = #tpu.dot_dimension_numbers<[1], [0], [0], [1], [0, 0, 1, 1], [], []>} : vector<2x8xf32>, vector<8x16xf32>, vector<2x16xf32> -> vector<2x16xf32>
    %c1 = arith.constant 1 : index
    %c0_24 = arith.constant 0 : index
    %c0_25 = arith.constant 0 : index
    %52 = vector.load %arg7[%c1, %c0_24, %c0_25] : memref<2x2x16xf32, #tpu.memory_space<vmem>>, vector<1x2x16xf32>
    %53 = vector.shape_cast %52 : vector<1x2x16xf32> to vector<2x16xf32>
    %54 = vector.shape_cast %51 : vector<2x16xf32> to vector<1x2x16xf32>
    tpu.vector_store %arg7[%c1, %c0_24, %c0_25], %54 {strides = array<i32>} : memref<2x2x16xf32, #tpu.memory_space<vmem>>, vector<1x2x16xf32>,
    return
  }
  func.func @transform_0(%arg0: i32) -> (i32, i32) {
    %c0_i32 = arith.constant 0 : i32
    %c0_i32_0 = arith.constant 0 : i32
    return %arg0, %c0_i32 : i32, i32
  }
  func.func @transform_1(%arg0: i32) -> (i32, i32) {
    %c0_i32 = arith.constant 0 : i32
    %c0_i32_0 = arith.constant 0 : i32
    %c0_i32_1 = arith.constant 0 : i32
    return %c0_i32, %c0_i32_0 : i32, i32
  }
  func.func @transform_2(%arg0: i32) -> (i32, i32) {
    %c0_i32 = arith.constant 0 : i32
    %c0_i32_0 = arith.constant 0 : i32
    %c0_i32_1 = arith.constant 0 : i32
    return %c0_i32, %c0_i32_0 : i32, i32
  }
  func.func @transform_3(%arg0: i32) -> (i32, i32) {
    %c0_i32 = arith.constant 0 : i32
    %c0_i32_0 = arith.constant 0 : i32
    %c0_i32_1 = arith.constant 0 : i32
    return %c0_i32, %c0_i32_0 : i32, i32
  }
  func.func @transform_4(%arg0: i32) -> (i32, i32) {
    %c0_i32 = arith.constant 0 : i32
    %c0_i32_0 = arith.constant 0 : i32
    %c0_i32_1 = arith.constant 0 : i32
    return %c0_i32, %c0_i32_0 : i32, i32
  }
  func.func @transform_5(%arg0: i32) -> (i32, i32) {
    %c0_i32 = arith.constant 0 : i32
    %c0_i32_0 = arith.constant 0 : i32
    %c0_i32_1 = arith.constant 0 : i32
    return %c0_i32, %c0_i32_0 : i32, i32
  }
  func.func @transform_6(%arg0: i32) -> (i32, i32, i32) {
    %c0_i32 = arith.constant 0 : i32
    %c0_i32_0 = arith.constant 0 : i32
    %c0_i32_1 = arith.constant 0 : i32
    return %c0_i32, %arg0, %c0_i32_0 : i32, i32, i32
  }
}

</mosaic_0001>

<llo_original>
// kernel: tpu_custom_call.1
$region0: #{tpu_custom_call.1}
  #allocation0 [shape = 'u32[]', space=smem, size = 0x4, offset = 0x4, fixed_abs, tag = 'smem constant byte address 0x4 - core index']
  #allocation1 [shape = 'u32[144,128]{1,0:T(1,128)}', space=vmem, size = 0x12000, scoped, tag = 'internal scratch']
  %s0 = inlined_call_operand.hbm [shape: f32[2,16], index: 0, kind: input, shape index: {}]
  %s1 = inlined_call_operand.hbm [shape: f32[8,16], index: 1, kind: input, shape index: {}]
  %s2 = inlined_call_operand.hbm [shape: f32[16,32], index: 2, kind: input, shape index: {}]
  %s3 = inlined_call_operand.hbm [shape: f32[16,32], index: 3, kind: input, shape index: {}]
  %s4 = inlined_call_operand.vmem [shape: f32[1,32], index: 4, kind: input, shape index: {}]
  %s5 = inlined_call_operand.vmem [shape: f32[2,32], index: 5, kind: input, shape index: {}]
  %s6 = inlined_call_operand.hbm [shape: f32[2,2,16], index: 6, kind: output, shape index: {}]
  %s7 = sld [smem:[#allocation0]]
  $region50: #{tpu_custom_call.1} parent=0
    _
  %s9 = ssub.s32 1, %s7
  %s10 = scalar_select 0, %s9, %s7
  $region1: #{tpu_custom_call.1} parent=0
    #allocation2 [shape = 'u8[1024]{0}', space=vmem, size = 0x400, scoped, tag = 'input window, operand 0, single buffered']
    #allocation3 [shape = 's32[1]{0}', space=sflag, size = 0x4, scoped, tag = 'scoped memory for tpu_custom_call.1']
    #allocation4 [shape = 's32[1]{0}', space=sflag, size = 0x4, scoped, tag = 'scoped memory for tpu_custom_call.1']
    #allocation5 [shape = 'u8[4096]{0}', space=vmem, size = 0x1000, scoped, tag = 'input window, operand 1, single buffered']
    #allocation6 [shape = 's32[1]{0}', space=sflag, size = 0x4, scoped, tag = 'scoped memory for tpu_custom_call.1']
    #allocation7 [shape = 'u8[8192]{0}', space=vmem, size = 0x2000, scoped, tag = 'input window, operand 2, single buffered']
    #allocation8 [shape = 'u8[8192]{0}', space=vmem, size = 0x2000, scoped, tag = 'input window, operand 3, single buffered']
    #allocation9 [shape = 's32[1]{0}', space=sflag, size = 0x4, scoped, tag = 'scoped memory for tpu_custom_call.1']
    #allocation10 [shape = 'u8[2048]{0}', space=vmem, size = 0x800, scoped, tag = 'output window, operand 0, single buffered']
    %11 = vsyncpa [#allocation3], 0
    %12 = vsyncpa [#allocation6], 0
    %13 = vsyncpa [#allocation9], 0
    %14 = vsyncpa [#allocation4], 0
    // Predicated region
    $region2: #{tpu_custom_call.1} parent=1 // pred_check
      _
    $region3: #{tpu_custom_call.1} parent=1 // pred_check_branch
      %16 = sbr.rel (0) target = $region5
    $region4: #{tpu_custom_call.1} parent=1 // pred_region
      %s18 = ssub.s32 32, 32
      %19 = vsyncadd [#allocation3], %s18
      %s21 = sshll.u32 [#allocation2], 4
      %s22 = int_to_ptr.vmem [resolvable:$true] %s21
      %24 = dma.hbm_to_vmem [thread:$0]  %s0, 32, %s22, [#allocation3]
    $region5: #{tpu_custom_call.1} parent=1 // pred_fallthru
      _
    // Predicated region
    $region6: #{tpu_custom_call.1} parent=1 // pred_check
      _
    $region7: #{tpu_custom_call.1} parent=1 // pred_check_branch
      %26 = sbr.rel (0) target = $region9
    $region8: #{tpu_custom_call.1} parent=1 // pred_region
      %s28 = ssub.s32 128, 128
      %29 = vsyncadd [#allocation6], %s28
      %s31 = sshll.u32 [#allocation5], 4
      %s32 = int_to_ptr.vmem [resolvable:$true] %s31
      %34 = dma.hbm_to_vmem [thread:$0]  %s1, 128, %s32, [#allocation6]
    $region9: #{tpu_custom_call.1} parent=1 // pred_fallthru
      _
    // Predicated region
    $region10: #{tpu_custom_call.1} parent=1 // pred_check
      _
    $region11: #{tpu_custom_call.1} parent=1 // pred_check_branch
      %36 = sbr.rel (0) target = $region13
    $region12: #{tpu_custom_call.1} parent=1 // pred_region
      %s38 = ssub.s32 256, 256
      %39 = vsyncadd [#allocation6], %s38
      %s40 = sshll.u32 [#allocation7], 4
      %s41 = int_to_ptr.vmem [resolvable:$true] %s40
      %46 = dma.hbm_to_vmem [thread:$0]  %s2, 256, %s41, [#allocation6], 128, 128, 8
    $region13: #{tpu_custom_call.1} parent=1 // pred_fallthru
      _
    // Predicated region
    $region14: #{tpu_custom_call.1} parent=1 // pred_check
      _
    $region15: #{tpu_custom_call.1} parent=1 // pred_check_branch
      %48 = sbr.rel (0) target = $region17
    $region16: #{tpu_custom_call.1} parent=1 // pred_region
      %s50 = ssub.s32 256, 256
      %51 = vsyncadd [#allocation9], %s50
      %s52 = sshll.u32 [#allocation8], 4
      %s53 = int_to_ptr.vmem [resolvable:$true] %s52
      %58 = dma.hbm_to_vmem [thread:$0]  %s3, 256, %s53, [#allocation9], 128, 128, 8
    $region17: #{tpu_custom_call.1} parent=1 // pred_fallthru
      _
    // Predicated region
    $region18: #{tpu_custom_call.1} parent=1 // pred_check
      _
    $region19: #{tpu_custom_call.1} parent=1 // pred_check_branch
      %60 = sbr.rel (0) target = $region21
    $region20: #{tpu_custom_call.1} parent=1 // pred_region
      _
    $region21: #{tpu_custom_call.1} parent=1 // pred_fallthru
      _
    // Predicated region
    $region22: #{tpu_custom_call.1} parent=1 // pred_check
      _
    $region23: #{tpu_custom_call.1} parent=1 // pred_check_branch
      %62 = sbr.rel (0) target = $region25
    $region24: #{tpu_custom_call.1} parent=1 // pred_region
      _
    $region25: #{tpu_custom_call.1} parent=1 // pred_fallthru
      _
    // Predicated region
    $region26: #{tpu_custom_call.1} parent=1 // pred_check
      _
    $region27: #{tpu_custom_call.1} parent=1 // pred_check_branch
      %64 = sbr.rel (0) target = $region29
    $region28: #{tpu_custom_call.1} parent=1 // pred_region
      %65 = dma.done [#allocation3], 32
    $region29: #{tpu_custom_call.1} parent=1 // pred_fallthru
      _
    // Predicated region
    $region30: #{tpu_custom_call.1} parent=1 // pred_check
      _
    $region31: #{tpu_custom_call.1} parent=1 // pred_check_branch
      %67 = sbr.rel (0) target = $region33
    $region32: #{tpu_custom_call.1} parent=1 // pred_region
      %68 = dma.done [#allocation6], 128
    $region33: #{tpu_custom_call.1} parent=1 // pred_fallthru
      _
    // Predicated region
    $region34: #{tpu_custom_call.1} parent=1 // pred_check
      _
    $region35: #{tpu_custom_call.1} parent=1 // pred_check_branch
      %70 = sbr.rel (0) target = $region37
    $region36: #{tpu_custom_call.1} parent=1 // pred_region
      %71 = dma.done [#allocation6], 256
    $region37: #{tpu_custom_call.1} parent=1 // pred_fallthru
      _
    // Predicated region
    $region38: #{tpu_custom_call.1} parent=1 // pred_check
      _
    $region39: #{tpu_custom_call.1} parent=1 // pred_check_branch
      %73 = sbr.rel (0) target = $region41
    $region40: #{tpu_custom_call.1} parent=1 // pred_region
      %74 = dma.done [#allocation9], 256
    $region41: #{tpu_custom_call.1} parent=1 // pred_fallthru
      _
    %v75 = vld [vmem:[#allocation2] sm:$0x3]
    %v76 = vld [vmem:[#allocation5] sm:$0xff]
    %v77 = vld [vmem:[#allocation7] sm:$0xff]
    %v78 = vld [vmem:[#allocation7 + $0x8] sm:$0xff]
    %v79 = vld [vmem:[%s4] sm:$0x1]
    %v81 = vlaneseq
    %v82 = vshrl.u32 %v81, 7
    %v83 = vsub.s32 0, %v82
    %v84 = vrot.slane %v79, %v83
    %vm86 = vcmask 130048
    %v88 = vsel %vm86, %v75, 0
    %90 = vmatprep.subr.mxu0 0.0
    %91 = vmatpush1.msra.mxu0 %v77
    %92 = vmatprep.subr.mxu0 0.0
    %93 = vmatpush1.msra.mxu0 %v78
    %94 = vmatprep.subr.mxu0 0.0
    %95 = vmatpush1.msra.mxu0 0.0
    %96 = vmatprep.subr.mxu0 0.0
    %97 = vmatpush1.msra.mxu0 0.0
    %98 = vmatprep.subr.mxu0 0.0
    %99 = vmatpush1.msra.mxu0 0.0
    %100 = vmatprep.subr.mxu0 0.0
    %101 = vmatpush1.msra.mxu0 0.0
    %102 = vmatprep.subr.mxu0 0.0
    %103 = vmatpush1.msra.mxu0 0.0
    %104 = vmatprep.subr.mxu0 0.0
    %105 = vmatpush1.msra.mxu0 0.0
    %106 = vmatprep.subr.mxu0 0.0
    %107 = vmatpush1.msra.mxu0 0.0
    %108 = vmatprep.subr.mxu0 0.0
    %109 = vmatpush1.msra.mxu0 0.0
    %110 = vmatprep.subr.mxu0 0.0
    %111 = vmatpush1.msra.mxu0 0.0
    %112 = vmatprep.subr.mxu0 0.0
    %113 = vmatpush1.msra.mxu0 0.0
    %114 = vmatprep.subr.mxu0 0.0
    %115 = vmatpush1.msra.mxu0 0.0
    %116 = vmatprep.subr.mxu0 0.0
    %117 = vmatpush1.msra.mxu0 0.0
    %118 = vmatprep.subr.mxu0 0.0
    %119 = vmatpush1.msra.mxu0 0.0
    %120 = vmatprep.subr.mxu0 0.0
    %121 = vmatpush1.msra.mxu0 0.0
    %122 = vmatprep.subr.mxu0 0.0
    %123 = vmatpush1.msra.mxu0 0.0
    %124 = vmatprep.subr.mxu0 0.0
    %125 = vmatpush1.msra.mxu0 0.0
    %126 = vmatprep.subr.mxu0 0.0
    %127 = vmatpush1.msra.mxu0 0.0
    %128 = vmatprep.subr.mxu0 0.0
    %129 = vmatpush1.msra.mxu0 0.0
    %130 = vmatprep.subr.mxu0 0.0
    %131 = vmatpush1.msra.mxu0 0.0
    %132 = vmatprep.subr.mxu0 0.0
    %133 = vmatpush1.msra.mxu0 0.0
    %134 = vmatprep.subr.mxu0 0.0
    %135 = vmatpush1.msra.mxu0 0.0
    %136 = vmatprep.subr.mxu0 0.0
    %137 = vmatpush1.msra.mxu0 0.0
    %138 = vmatprep.subr.mxu0 0.0
    %139 = vmatpush1.msra.mxu0 0.0
    %140 = vmatprep.subr.mxu0 0.0
    %141 = vmatpush1.msra.mxu0 0.0
    %142 = vmatprep.subr.mxu0 0.0
    %143 = vmatpush1.msra.mxu0 0.0
    %144 = vmatprep.subr.mxu0 0.0
    %145 = vmatpush1.msra.mxu0 0.0
    %146 = vmatprep.subr.mxu0 0.0
    %147 = vmatpush1.msra.mxu0 0.0
    %148 = vmatprep.subr.mxu0 0.0
    %149 = vmatpush1.msra.mxu0 0.0
    %150 = vmatprep.subr.mxu0 0.0
    %151 = vmatpush1.msra.mxu0 0.0
    %152 = vmatprep.subr.mxu0 0.0
    %153 = vmatpush1.msra.mxu0 0.0
    %154 = vmatprep.mubr.f32.mxu0 0.0
    %155 = vmatmul.mubr.f32.gmra.mrb[0].mxu0 %v88
    %v156 = vpop.f32.mrb[0].mxu0
    %v157 = vadd.f32 %v84, %v156
    %v158 = vpop.f32.mrb[0].mxu0
    %159 = vdwg.mxu0
    %v160 = vld [vmem:[#allocation8] sm:$0xff]
    %v161 = vld [vmem:[#allocation8 + $0x8] sm:$0xff]
    %v163 = vsel %vm86, %v76, 0
    %165 = vmatprep.subr.mxu0 0.0
    %166 = vmatpush1.msra.mxu0 %v160
    %167 = vmatprep.subr.mxu0 0.0
    %168 = vmatpush1.msra.mxu0 %v161
    %169 = vmatprep.subr.mxu0 0.0
    %170 = vmatpush1.msra.mxu0 0.0
    %171 = vmatprep.subr.mxu0 0.0
    %172 = vmatpush1.msra.mxu0 0.0
    %173 = vmatprep.subr.mxu0 0.0
    %174 = vmatpush1.msra.mxu0 0.0
    %175 = vmatprep.subr.mxu0 0.0
    %176 = vmatpush1.msra.mxu0 0.0
    %177 = vmatprep.subr.mxu0 0.0
    %178 = vmatpush1.msra.mxu0 0.0
    %179 = vmatprep.subr.mxu0 0.0
    %180 = vmatpush1.msra.mxu0 0.0
    %181 = vmatprep.subr.mxu0 0.0
    %182 = vmatpush1.msra.mxu0 0.0
    %183 = vmatprep.subr.mxu0 0.0
    %184 = vmatpush1.msra.mxu0 0.0
    %185 = vmatprep.subr.mxu0 0.0
    %186 = vmatpush1.msra.mxu0 0.0
    %187 = vmatprep.subr.mxu0 0.0
    %188 = vmatpush1.msra.mxu0 0.0
    %189 = vmatprep.subr.mxu0 0.0
    %190 = vmatpush1.msra.mxu0 0.0
    %191 = vmatprep.subr.mxu0 0.0
    %192 = vmatpush1.msra.mxu0 0.0
    %193 = vmatprep.subr.mxu0 0.0
    %194 = vmatpush1.msra.mxu0 0.0
    %195 = vmatprep.subr.mxu0 0.0
    %196 = vmatpush1.msra.mxu0 0.0
    %197 = vmatprep.subr.mxu0 0.0
    %198 = vmatpush1.msra.mxu0 0.0
    %199 = vmatprep.subr.mxu0 0.0
    %200 = vmatpush1.msra.mxu0 0.0
    %201 = vmatprep.subr.mxu0 0.0
    %202 = vmatpush1.msra.mxu0 0.0
    %203 = vmatprep.subr.mxu0 0.0
    %204 = vmatpush1.msra.mxu0 0.0
    %205 = vmatprep.subr.mxu0 0.0
    %206 = vmatpush1.msra.mxu0 0.0
    %207 = vmatprep.subr.mxu0 0.0
    %208 = vmatpush1.msra.mxu0 0.0
    %209 = vmatprep.subr.mxu0 0.0
    %210 = vmatpush1.msra.mxu0 0.0
    %211 = vmatprep.subr.mxu0 0.0
    %212 = vmatpush1.msra.mxu0 0.0
    %213 = vmatprep.subr.mxu0 0.0
    %214 = vmatpush1.msra.mxu0 0.0
    %215 = vmatprep.subr.mxu0 0.0
    %216 = vmatpush1.msra.mxu0 0.0
    %217 = vmatprep.subr.mxu0 0.0
    %218 = vmatpush1.msra.mxu0 0.0
    %219 = vmatprep.subr.mxu0 0.0
    %220 = vmatpush1.msra.mxu0 0.0
    %221 = vmatprep.subr.mxu0 0.0
    %222 = vmatpush1.msra.mxu0 0.0
    %223 = vmatprep.subr.mxu0 0.0
    %224 = vmatpush1.msra.mxu0 0.0
    %225 = vmatprep.subr.mxu0 0.0
    %226 = vmatpush1.msra.mxu0 0.0
    %227 = vmatprep.subr.mxu0 0.0
    %228 = vmatpush1.msra.mxu0 0.0
    %229 = vmatprep.mubr.f32.mxu0 0.0
    %230 = vmatmul.mubr.f32.gmra.mrb[0].mxu0 %v163
    %v231 = vpop.f32.mrb[0].mxu0
    %v232 = vadd.f32 0.0, %v231
    %v233 = vpop.f32.mrb[0].mxu0
    %234 = vdwg.mxu0
    %v237 = vunpack.c.l.s4 1966171168
    %v238 = vunpack.c.0.s8 %v237
    %v239 = vlaneseq
    %v240 = vshrl.u32 %v239, 7
    %v241 = vsub.s32 %v238, %v240
    %v242 = vrot.slane %v157, %v241
    %v243 = vcombine.high %v242, %v242
    %v245 = vunpack.c.l.s4 1966171168
    %v246 = vunpack.c.0.s8 %v245
    %v247 = vlaneseq
    %v248 = vshrl.u32 %v247, 7
    %v249 = vsub.s32 %v246, %v248
    %v250 = vrot.slane %v242, %v249
    %v252 = vunpack.c.l.s4 1966171168
    %v253 = vunpack.c.0.s8 %v252
    %v254 = vlaneseq
    %v255 = vshrl.u32 %v254, 7
    %v256 = vsub.s32 %v253, %v255
    %v257 = vrot.slane %v243, %v256
    %v258 = vlaneseq
    %v259 = vshrl.u32 %v258, 7
    %v260 = vsub.s32 0, %v259
    %v261 = vrot.slane %v250, %v260
    %v262 = vlaneseq
    %v263 = vshrl.u32 %v262, 7
    %v264 = vsub.s32 0, %v263
    %v265 = vrot.slane %v257, %v264
    %v268 = vadd.f32 %v261, %v232
    %v269 = vadd.f32 %v265, %v232
    %v270 = vmax.f32 %v268, 0.0
    %v271 = vmax.f32 %v269, 0.0
    %v272 = vld [vmem:[%s5] sm:$0x3]
    %v273 = vlaneseq
    %v274 = vshrl.u32 %v273, 7
    %v275 = vsub.s32 0, %v274
    %v276 = vrot.slane %v272, %v275
    %v277 = vmul.f32 %v270, %v276
    %v278 = vmul.f32 %v271, %v276
    %vm279 = vcmask 261120
    %v280 = vsel %vm279, %v277, 0.0
    %281 = vadd.xlane.f32.xlu0 %v280
    %v282 = vpop.xlane.xlu0 %281
    %v283 = vsel %vm279, %v278, 0.0
    %284 = vadd.xlane.f32.xlu0 %v283
    %v285 = vpop.xlane.xlu0 %284
    %v288 = vlaneseq
    %v289 = vand.u32 %v288, 127
    %v290 = vlaneseq
    %v291 = vshrl.u32 %v290, 7
    %v292 = vsub.s32 %v289, %v291
    %v293 = vrot.slane %v282, %v292
    %v294 = vlaneseq
    %v295 = vshrl.u32 %v294, 7
    %v296 = vsub.s32 %v289, %v295
    %v297 = vrot.slane %v285, %v296
    %vm298 = vcmask 1041409
    %v299 = vsel %vm298, %v297, %v293
    %vm301 = vcmask 58368
    %v302 = vsel %vm301, %v299, -inf
    %303 = vmax.xlane.f32.xlu0 %v302
    %v304 = vpop.xlane.xlu0 %303
    %v306 = vlaneseq
    %v307 = vshrl.u32 %v306, 7
    %v308 = vsub.s32 0, %v307
    %v309 = vrot.slane %v304, %v308
    %v310 = vlaneseq
    %v311 = vshrl.u32 %v310, 7
    %v312 = vsub.s32 1, %v311
    %v313 = vrot.slane %v304, %v312
    %v316 = vsub.f32 %v282, %v309
    %v317 = vsub.f32 %v285, %v313
    %v318 = vmul.f32 %v316, 1.442695
    %v319 = vpow.pop %v318
    %v320 = vmul.f32 %v317, 1.442695
    %v321 = vpow.pop %v320
    %324 = vset.pattern.permute.xlu0 0
    %325 = vperm.xlu0 %324, %v319
    %v326 = vpop.permute.xlu0 %325
    %327 = vset.pattern.permute.xlu0 0
    %328 = vperm.xlu0 %327, %v321
    %v329 = vpop.permute.xlu0 %328
    %v330 = vlaneseq
    %v331 = vshrl.u32 %v330, 7
    %v332 = vsub.s32 %v289, %v331
    %v333 = vrot.slane %v326, %v332
    %v334 = vlaneseq
    %v335 = vshrl.u32 %v334, 7
    %v336 = vsub.s32 %v289, %v335
    %v337 = vrot.slane %v329, %v336
    %v338 = vsel %vm298, %v337, %v333
    %v340 = vsel %vm301, %v338, 0.0
    %341 = vadd.xlane.f32.xlu0 %v340
    %v342 = vpop.xlane.xlu0 %341
    %v343 = vrcp.pop %v342
    %v345 = vlaneseq
    %v346 = vshrl.u32 %v345, 7
    %v347 = vsub.s32 0, %v346
    %v348 = vrot.slane %v343, %v347
    %v349 = vlaneseq
    %v350 = vshrl.u32 %v349, 7
    %v351 = vsub.s32 1, %v350
    %v352 = vrot.slane %v343, %v351
    %v355 = vmul.f32 %v319, %v348
    %v356 = vmul.f32 %v321, %v352
    %359 = vset.pattern.permute.xlu0 0
    %360 = vperm.xlu0 %359, %v355
    %v361 = vpop.permute.xlu0 %360
    %362 = vset.pattern.permute.xlu0 0
    %363 = vperm.xlu0 %362, %v356
    %v364 = vpop.permute.xlu0 %363
    %v365 = vlaneseq
    %v366 = vshrl.u32 %v365, 7
    %v367 = vsub.s32 %v289, %v366
    %v368 = vrot.slane %v361, %v367
    %v369 = vlaneseq
    %v370 = vshrl.u32 %v369, 7
    %v371 = vsub.s32 %v289, %v370
    %v372 = vrot.slane %v364, %v371
    %v373 = vsel %vm298, %v372, %v368
    %vm374 = vcmask 64512
    %v375 = vsel %vm374, %v373, 0
    %377 = vmatprep.subr.mxu0 0.0
    %378 = vmatpush1.msra.mxu0 %v76
    %379 = vmatprep.subr.mxu0 0.0
    %380 = vmatpush1.msra.mxu0 0.0
    %381 = vmatprep.subr.mxu0 0.0
    %382 = vmatpush1.msra.mxu0 0.0
    %383 = vmatprep.subr.mxu0 0.0
    %384 = vmatpush1.msra.mxu0 0.0
    %385 = vmatprep.subr.mxu0 0.0
    %386 = vmatpush1.msra.mxu0 0.0
    %387 = vmatprep.subr.mxu0 0.0
    %388 = vmatpush1.msra.mxu0 0.0
    %389 = vmatprep.subr.mxu0 0.0
    %390 = vmatpush1.msra.mxu0 0.0
    %391 = vmatprep.subr.mxu0 0.0
    %392 = vmatpush1.msra.mxu0 0.0
    %393 = vmatprep.subr.mxu0 0.0
    %394 = vmatpush1.msra.mxu0 0.0
    %395 = vmatprep.subr.mxu0 0.0
    %396 = vmatpush1.msra.mxu0 0.0
    %397 = vmatprep.subr.mxu0 0.0
    %398 = vmatpush1.msra.mxu0 0.0
    %399 = vmatprep.subr.mxu0 0.0
    %400 = vmatpush1.msra.mxu0 0.0
    %401 = vmatprep.subr.mxu0 0.0
    %402 = vmatpush1.msra.mxu0 0.0
    %403 = vmatprep.subr.mxu0 0.0
    %404 = vmatpush1.msra.mxu0 0.0
    %405 = vmatprep.subr.mxu0 0.0
    %406 = vmatpush1.msra.mxu0 0.0
    %407 = vmatprep.subr.mxu0 0.0
    %408 = vmatpush1.msra.mxu0 0.0
    %409 = vmatprep.subr.mxu0 0.0
    %410 = vmatpush1.msra.mxu0 0.0
    %411 = vmatprep.subr.mxu0 0.0
    %412 = vmatpush1.msra.mxu0 0.0
    %413 = vmatprep.subr.mxu0 0.0
    %414 = vmatpush1.msra.mxu0 0.0
    %415 = vmatprep.subr.mxu0 0.0
    %416 = vmatpush1.msra.mxu0 0.0
    %417 = vmatprep.subr.mxu0 0.0
    %418 = vmatpush1.msra.mxu0 0.0
    %419 = vmatprep.subr.mxu0 0.0
    %420 = vmatpush1.msra.mxu0 0.0
    %421 = vmatprep.subr.mxu0 0.0
    %422 = vmatpush1.msra.mxu0 0.0
    %423 = vmatprep.subr.mxu0 0.0
    %424 = vmatpush1.msra.mxu0 0.0
    %425 = vmatprep.subr.mxu0 0.0
    %426 = vmatpush1.msra.mxu0 0.0
    %427 = vmatprep.subr.mxu0 0.0
    %428 = vmatpush1.msra.mxu0 0.0
    %429 = vmatprep.subr.mxu0 0.0
    %430 = vmatpush1.msra.mxu0 0.0
    %431 = vmatprep.subr.mxu0 0.0
    %432 = vmatpush1.msra.mxu0 0.0
    %433 = vmatprep.subr.mxu0 0.0
    %434 = vmatpush1.msra.mxu0 0.0
    %435 = vmatprep.subr.mxu0 0.0
    %436 = vmatpush1.msra.mxu0 0.0
    %437 = vmatprep.subr.mxu0 0.0
    %438 = vmatpush1.msra.mxu0 0.0
    %439 = vmatprep.subr.mxu0 0.0
    %440 = vmatpush1.msra.mxu0 0.0
    %441 = vmatprep.mubr.f32.mxu0 0.0
    %442 = vmatmul.mubr.f32.gmra.mrb[0].mxu0 %v375
    %v443 = vpop.f32.mrb[0].mxu0
    %v444 = vadd.f32 0.0, %v443
    %v445 = vpop.f32.mrb[0].mxu0
    %446 = vdwg.mxu0
    %vm447 = vcmask 123904
    %448 = vst.msk [vmem:[#allocation10] sm:$0x3] %vm447, %v444
    %v449 = vlaneseq
    %v450 = vshrl.u32 %v449, 7
    %v451 = vsub.s32 1, %v450
    %v452 = vrot.slane %v272, %v451
    %v453 = vmul.f32 %v270, %v452
    %v454 = vmul.f32 %v271, %v452
    %v455 = vsel %vm279, %v453, 0.0
    %456 = vadd.xlane.f32.xlu0 %v455
    %v457 = vpop.xlane.xlu0 %456
    %v458 = vsel %vm279, %v454, 0.0
    %459 = vadd.xlane.f32.xlu0 %v458
    %v460 = vpop.xlane.xlu0 %459
    %v463 = vlaneseq
    %v464 = vshrl.u32 %v463, 7
    %v465 = vsub.s32 %v289, %v464
    %v466 = vrot.slane %v457, %v465
    %v467 = vlaneseq
    %v468 = vshrl.u32 %v467, 7
    %v469 = vsub.s32 %v289, %v468
    %v470 = vrot.slane %v460, %v469
    %v471 = vsel %vm298, %v470, %v466
    %v473 = vsel %vm301, %v471, -inf
    %474 = vmax.xlane.f32.xlu0 %v473
    %v475 = vpop.xlane.xlu0 %474
    %v477 = vlaneseq
    %v478 = vshrl.u32 %v477, 7
    %v479 = vsub.s32 0, %v478
    %v480 = vrot.slane %v475, %v479
    %v481 = vlaneseq
    %v482 = vshrl.u32 %v481, 7
    %v483 = vsub.s32 1, %v482
    %v484 = vrot.slane %v475, %v483
    %v487 = vsub.f32 %v457, %v480
    %v488 = vsub.f32 %v460, %v484
    %v489 = vmul.f32 %v487, 1.442695
    %v490 = vpow.pop %v489
    %v491 = vmul.f32 %v488, 1.442695
    %v492 = vpow.pop %v491
    %495 = vset.pattern.permute.xlu0 0
    %496 = vperm.xlu0 %495, %v490
    %v497 = vpop.permute.xlu0 %496
    %498 = vset.pattern.permute.xlu0 0
    %499 = vperm.xlu0 %498, %v492
    %v500 = vpop.permute.xlu0 %499
    %v501 = vlaneseq
    %v502 = vshrl.u32 %v501, 7
    %v503 = vsub.s32 %v289, %v502
    %v504 = vrot.slane %v497, %v503
    %v505 = vlaneseq
    %v506 = vshrl.u32 %v505, 7
    %v507 = vsub.s32 %v289, %v506
    %v508 = vrot.slane %v500, %v507
    %v509 = vsel %vm298, %v508, %v504
    %v511 = vsel %vm301, %v509, 0.0
    %512 = vadd.xlane.f32.xlu0 %v511
    %v513 = vpop.xlane.xlu0 %512
    %v514 = vrcp.pop %v513
    %v516 = vlaneseq
    %v517 = vshrl.u32 %v516, 7
    %v518 = vsub.s32 0, %v517
    %v519 = vrot.slane %v514, %v518
    %v520 = vlaneseq
    %v521 = vshrl.u32 %v520, 7
    %v522 = vsub.s32 1, %v521
    %v523 = vrot.slane %v514, %v522
    %v526 = vmul.f32 %v490, %v519
    %v527 = vmul.f32 %v492, %v523
    %530 = vset.pattern.permute.xlu0 0
    %531 = vperm.xlu0 %530, %v526
    %v532 = vpop.permute.xlu0 %531
    %533 = vset.pattern.permute.xlu0 0
    %534 = vperm.xlu0 %533, %v527
    %v535 = vpop.permute.xlu0 %534
    %v536 = vlaneseq
    %v537 = vshrl.u32 %v536, 7
    %v538 = vsub.s32 %v289, %v537
    %v539 = vrot.slane %v532, %v538
    %v540 = vlaneseq
    %v541 = vshrl.u32 %v540, 7
    %v542 = vsub.s32 %v289, %v541
    %v543 = vrot.slane %v535, %v542
    %v544 = vsel %vm298, %v543, %v539
    %v545 = vsel %vm374, %v544, 0
    %547 = vmatprep.subr.mxu0 0.0
    %548 = vmatpush1.msra.mxu0 %v76
    %549 = vmatprep.subr.mxu0 0.0
    %550 = vmatpush1.msra.mxu0 0.0
    %551 = vmatprep.subr.mxu0 0.0
    %552 = vmatpush1.msra.mxu0 0.0
    %553 = vmatprep.subr.mxu0 0.0
    %554 = vmatpush1.msra.mxu0 0.0
    %555 = vmatprep.subr.mxu0 0.0
    %556 = vmatpush1.msra.mxu0 0.0
    %557 = vmatprep.subr.mxu0 0.0
    %558 = vmatpush1.msra.mxu0 0.0
    %559 = vmatprep.subr.mxu0 0.0
    %560 = vmatpush1.msra.mxu0 0.0
    %561 = vmatprep.subr.mxu0 0.0
    %562 = vmatpush1.msra.mxu0 0.0
    %563 = vmatprep.subr.mxu0 0.0
    %564 = vmatpush1.msra.mxu0 0.0
    %565 = vmatprep.subr.mxu0 0.0
    %566 = vmatpush1.msra.mxu0 0.0
    %567 = vmatprep.subr.mxu0 0.0
    %568 = vmatpush1.msra.mxu0 0.0
    %569 = vmatprep.subr.mxu0 0.0
    %570 = vmatpush1.msra.mxu0 0.0
    %571 = vmatprep.subr.mxu0 0.0
    %572 = vmatpush1.msra.mxu0 0.0
    %573 = vmatprep.subr.mxu0 0.0
    %574 = vmatpush1.msra.mxu0 0.0
    %575 = vmatprep.subr.mxu0 0.0
    %576 = vmatpush1.msra.mxu0 0.0
    %577 = vmatprep.subr.mxu0 0.0
    %578 = vmatpush1.msra.mxu0 0.0
    %579 = vmatprep.subr.mxu0 0.0
    %580 = vmatpush1.msra.mxu0 0.0
    %581 = vmatprep.subr.mxu0 0.0
    %582 = vmatpush1.msra.mxu0 0.0
    %583 = vmatprep.subr.mxu0 0.0
    %584 = vmatpush1.msra.mxu0 0.0
    %585 = vmatprep.subr.mxu0 0.0
    %586 = vmatpush1.msra.mxu0 0.0
    %587 = vmatprep.subr.mxu0 0.0
    %588 = vmatpush1.msra.mxu0 0.0
    %589 = vmatprep.subr.mxu0 0.0
    %590 = vmatpush1.msra.mxu0 0.0
    %591 = vmatprep.subr.mxu0 0.0
    %592 = vmatpush1.msra.mxu0 0.0
    %593 = vmatprep.subr.mxu0 0.0
    %594 = vmatpush1.msra.mxu0 0.0
    %595 = vmatprep.subr.mxu0 0.0
    %596 = vmatpush1.msra.mxu0 0.0
    %597 = vmatprep.subr.mxu0 0.0
    %598 = vmatpush1.msra.mxu0 0.0
    %599 = vmatprep.subr.mxu0 0.0
    %600 = vmatpush1.msra.mxu0 0.0
    %601 = vmatprep.subr.mxu0 0.0
    %602 = vmatpush1.msra.mxu0 0.0
    %603 = vmatprep.subr.mxu0 0.0
    %604 = vmatpush1.msra.mxu0 0.0
    %605 = vmatprep.subr.mxu0 0.0
    %606 = vmatpush1.msra.mxu0 0.0
    %607 = vmatprep.subr.mxu0 0.0
    %608 = vmatpush1.msra.mxu0 0.0
    %609 = vmatprep.subr.mxu0 0.0
    %610 = vmatpush1.msra.mxu0 0.0
    %611 = vmatprep.mubr.f32.mxu0 0.0
    %612 = vmatmul.mubr.f32.gmra.mrb[0].mxu0 %v545
    %v613 = vpop.f32.mrb[0].mxu0
    %v614 = vadd.f32 0.0, %v613
    %v615 = vpop.f32.mrb[0].mxu0
    %616 = vdwg.mxu0
    %s617 = scalar_lea.vmem [#allocation10], 2
    %618 = vst.msk [vmem:[%s617] sm:$0x3] %vm447, %v614
    // Predicated region
    $region42: #{tpu_custom_call.1} parent=1 // pred_check
      _
    $region43: #{tpu_custom_call.1} parent=1 // pred_check_branch
      %620 = sbr.rel (0) target = $region45
    $region44: #{tpu_custom_call.1} parent=1 // pred_region
      %s622 = ssub.s32 64, 64
      %623 = vsyncadd [#allocation4], %s622
      %s624 = sshll.u32 [#allocation10], 4
      %s625 = int_to_ptr.vmem [resolvable:$true] %s624
      %630 = dma.vmem_to_hbm [thread:$0]  %s625, 64, %s6, [#allocation4], 32, 32, 2
    $region45: #{tpu_custom_call.1} parent=1 // pred_fallthru
      _
    // Predicated region
    $region46: #{tpu_custom_call.1} parent=1 // pred_check
      _
    $region47: #{tpu_custom_call.1} parent=1 // pred_check_branch
      %632 = sbr.rel (0) target = $region49
    $region48: #{tpu_custom_call.1} parent=1 // pred_region
      %633 = dma.done [#allocation4], 64
    $region49: #{tpu_custom_call.1} parent=1 // pred_fallthru
      _
    %634 = vsyncpa [#allocation3], 1
    %635 = vsyncpa [#allocation6], 1
    %636 = vsyncpa [#allocation9], 1
    %637 = vsyncpa [#allocation4], 1

</llo_original>
